<compile_context>
chip_gen: v7x
topology: tpu7x:2x2x1
jax: 0.10.0
libtpu: 0.0.40
codegen_flags: <defaults>
</compile_context>

<pallas_src>
import jax
import jax.numpy as jnp
from jax.experimental import pallas as pl
from jax.experimental.pallas import tpu as pltpu

H1 = 256   # fc1 width
H2 = 64    # fc2 width


def _round_up(n, m):
    return ((n + m - 1) // m) * m


def mlp_kernel(x_ref, w1_ref, b1_ref, w2_ref, b2_ref, w3_ref, b3_ref, o_ref):
    # fc1 + ReLU: bf16 MXU matmul, f32 accumulation; elementwise stays in f32
    # (v5e has no bf16 VPU, and the f32 accumulator already gives us f32).
    x_bf = x_ref[...].astype(jnp.bfloat16)
    h1 = jnp.dot(x_bf, w1_ref[...], preferred_element_type=jnp.float32)
    h1 = jnp.maximum(h1 + b1_ref[...], 0.0)
    # dropout1: identity in eval mode
    # TODO(synk): training-mode dropout (pltpu.prng_random_bits mask) not emitted; inference path only.

    # fc2 + ReLU (logical 64-wide, no lane padding: less VPU work / VMEM)
    h2 = jnp.dot(h1.astype(jnp.bfloat16), w2_ref[...],
                 preferred_element_type=jnp.float32)
    h2 = jnp.maximum(h2 + b2_ref[...], 0.0)
    # dropout2: identity in eval mode

    # fc3 logits, stored unpadded (masked vst; DMA-bound kernel so it's free)
    out = jnp.dot(h2.astype(jnp.bfloat16), w3_ref[...],
                  preferred_element_type=jnp.float32)
    o_ref[...] = (out + b3_ref[...]).astype(o_ref.dtype)


def mlp_forward(x, params, *, block_b=1024, vmem_budget_bytes=24 * 1024 * 1024):
    """x: (B, input_dim), f32 or bf16. params: dict with bf16 weights / f32 biases."""
    w1, b1 = params["w1"], params["b1"]
    w2, b2 = params["w2"], params["b2"]
    w3, b3 = params["w3"], params["b3"]
    num_classes = w3.shape[1]

    B, input_dim = x.shape
    x_item = jnp.dtype(x.dtype).itemsize
    out_dtype = jnp.float32

    # ---- batch tile ------------------------------------------------------
    # Multiple of 8 sublanes; at least 2 grid steps when B allows so the
    # "parallel" batch axis shards across v7x's two TensorCores.
    b8 = _round_up(B, 8)
    tb = min(block_b, b8)
    if b8 >= 16:
        tb = min(tb, _round_up(pl.cdiv(b8, 2), 8))

    # ---- VMEM budget (v5e 16 MiB scoped default is the binding case) -----
    w_bytes = ((w1.size + w2.size + w3.size) * 2
               + (b1.size + b2.size + b3.size) * 4)
    fixed = 2 * w_bytes  # conservative: assume weights double-buffered
    per_row = (2 * input_dim * x_item          # double-buffered x tile
               + 2 * num_classes * 4           # double-buffered output tile
               + (H1 + H2) * 8)                # h1/h2 f32 + bf16 intermediates
    max_rows = max(8, ((vmem_budget_bytes - fixed) // per_row) // 8 * 8)
    tb = max(8, min(tb, max_rows))

    b_pad = pl.cdiv(B, tb) * tb
    if b_pad != B:
        x = jnp.pad(x, ((0, b_pad - B), (0, 0)))
    grid = (b_pad // tb,)

    resident = lambda i: (0, 0)  # weights/biases pinned across all grid steps

    # Advisory cost from logical (unpadded) dims and actual dtypes.
    flops = 2 * B * (input_dim * H1 + H1 * H2 + H2 * num_classes)
    bytes_accessed = (B * input_dim * x_item + w_bytes + B * num_classes * 4)

    vmem_limit = int(min(48 * 1024 * 1024,
                         max(16 * 1024 * 1024,
                             fixed + tb * per_row + (2 << 20))))

    out = pl.pallas_call(
        mlp_kernel,
        out_shape=jax.ShapeDtypeStruct((b_pad, num_classes), out_dtype),
        grid=grid,
        in_specs=[
            pl.BlockSpec((tb, input_dim), lambda i: (i, 0)),
            pl.BlockSpec(w1.shape, resident),
            pl.BlockSpec(b1.shape, resident),
            pl.BlockSpec(w2.shape, resident),
            pl.BlockSpec(b2.shape, resident),
            pl.BlockSpec(w3.shape, resident),
            pl.BlockSpec(b3.shape, resident),
        ],
        out_specs=pl.BlockSpec((tb, num_classes), lambda i: (i, 0)),
        compiler_params=pltpu.CompilerParams(
            dimension_semantics=("parallel",),
            vmem_limit_bytes=vmem_limit),
        cost_estimate=pl.CostEstimate(
            flops=flops, transcendentals=0, bytes_accessed=bytes_accessed),
    )(x, w1, b1, w2, b2, w3, b3)

    return out[:B]   # strip batch padding; logits already unpadded


def init_params(key, input_dim, num_classes):
    """torch.nn.Linear-style uniform(+-1/sqrt(fan_in)) init.

    Weights stored as (in_features, out_features) (transpose of PyTorch) so the
    kernel computes x @ W.  Weights cast to bf16 (MXU-native); biases kept f32.
    No lane padding: fc2 stays 64 wide, fc3 output stays num_classes wide.
    """
    def linear(k, fan_in, fan_out):
        kw, kb = jax.random.split(k)
        bound = 1.0 / jnp.sqrt(fan_in)
        w = jax.random.uniform(kw, (fan_in, fan_out), jnp.float32, -bound, bound)
        b = jax.random.uniform(kb, (1, fan_out), jnp.float32, -bound, bound)
        return w, b

    k1, k2, k3 = jax.random.split(key, 3)
    w1, b1 = linear(k1, input_dim, H1)
    w2, b2 = linear(k2, H1, H2)
    w3, b3 = linear(k3, H2, num_classes)

    return {
        "w1": w1.astype(jnp.bfloat16), "b1": b1,
        "w2": w2.astype(jnp.bfloat16), "b2": b2,
        "w3": w3.astype(jnp.bfloat16), "b3": b3,
    }


def ref_forward(x, params):
    """Plain-JAX reference using the exact same bf16/f32 numerics."""
    h1 = jnp.maximum(
        jnp.dot(x.astype(jnp.bfloat16), params["w1"],
                preferred_element_type=jnp.float32) + params["b1"], 0.0)
    h2 = jnp.maximum(
        jnp.dot(h1.astype(jnp.bfloat16), params["w2"],
                preferred_element_type=jnp.float32) + params["b2"], 0.0)
    out = jnp.dot(h2.astype(jnp.bfloat16), params["w3"],
                  preferred_element_type=jnp.float32) + params["b3"]
    return out


if __name__ == "__main__":
    key = jax.random.PRNGKey(0)
    kx, kx2, kp = jax.random.split(key, 3)

    input_dim = 32
    num_classes = 10
    params = init_params(kp, input_dim, num_classes)

    # Case 1: small batch (single grid step).
    batch = 8
    x = jax.random.normal(kx, (batch, input_dim), dtype=jnp.float32)
    out = jax.block_until_ready(mlp_forward(x, params))
    ref = jax.block_until_ready(ref_forward(x, params))
    assert out.shape == (batch, num_classes)
    assert jnp.allclose(out, ref, atol=2e-3, rtol=2e-3), (
        float(jnp.max(jnp.abs(out - ref))))

    # Case 2: non-tile-aligned batch (>=2 grid steps + batch padding path).
    batch2 = 24
    x2 = jax.random.normal(kx2, (batch2, input_dim), dtype=jnp.float32)
    out2 = jax.block_until_ready(mlp_forward(x2, params))
    ref2 = jax.block_until_ready(ref_forward(x2, params))
    assert out2.shape == (batch2, num_classes)
    assert jnp.allclose(out2, ref2, atol=2e-3, rtol=2e-3), (
        float(jnp.max(jnp.abs(out2 - ref2))))

    print("KERNEL_OK")
</pallas_src>

<mosaic_0001>
module attributes {stable_mosaic.version = 11 : i64} {
  func.func @mlp_kernel(%arg0: i32, %arg1: memref<8x32xf32, #tpu.memory_space<vmem>>, %arg2: memref<32x256xbf16, #tpu.memory_space<vmem>>, %arg3: memref<1x256xf32, #tpu.memory_space<vmem>>, %arg4: memref<256x64xbf16, #tpu.memory_space<vmem>>, %arg5: memref<1x64xf32, #tpu.memory_space<vmem>>, %arg6: memref<64x10xbf16, #tpu.memory_space<vmem>>, %arg7: memref<1x10xf32, #tpu.memory_space<vmem>>, %arg8: memref<8x10xf32, #tpu.memory_space<vmem>>) attributes {dimension_semantics = [#tpu.dimension_semantics<parallel>], iteration_bounds = array<i64: 1>, scalar_prefetch = 0 : i64, scratch_operands = 0 : i64, tpu.core_type = #tpu.core_type<tc>, window_params = [{transform_indices = @transform_0, window_bounds = array<i64: 8, 32>}, {pipeline_mode = #tpu.pipeline_mode<synchronous>, transform_indices = @transform_1, window_bounds = array<i64: 32, 256>}, {pipeline_mode = #tpu.pipeline_mode<synchronous>, transform_indices = @transform_2, window_bounds = array<i64: 1, 256>}, {pipeline_mode = #tpu.pipeline_mode<synchronous>, transform_indices = @transform_3, window_bounds = array<i64: 256, 64>}, {pipeline_mode = #tpu.pipeline_mode<synchronous>, transform_indices = @transform_4, window_bounds = array<i64: 1, 64>}, {pipeline_mode = #tpu.pipeline_mode<synchronous>, transform_indices = @transform_5, window_bounds = array<i64: 64, 10>}, {pipeline_mode = #tpu.pipeline_mode<synchronous>, transform_indices = @transform_6, window_bounds = array<i64: 1, 10>}, {transform_indices = @transform_7, window_bounds = array<i64: 8, 10>}]} {
    %c0 = arith.constant 0 : index
    %c0_0 = arith.constant 0 : index
    %0 = vector.load %arg1[%c0, %c0_0] : memref<8x32xf32, #tpu.memory_space<vmem>>, vector<8x32xf32>
    %1 = arith.truncf %0 : vector<8x32xf32> to vector<8x32xbf16>
    %c0_1 = arith.constant 0 : index
    %c0_2 = arith.constant 0 : index
    %2 = vector.load %arg2[%c0_1, %c0_2] : memref<32x256xbf16, #tpu.memory_space<vmem>>, vector<32x256xbf16>
    %cst = arith.constant dense<0.000000e+00> : vector<8x256xf32>
    %3 = tpu.matmul %1, %2, %cst {dimension_numbers = #tpu.dot_dimension_numbers<[1], [0], [0], [1], [0, 0, 1, 1], [], []>} : vector<8x32xbf16>, vector<32x256xbf16>, vector<8x256xf32> -> vector<8x256xf32>
    %c0_3 = arith.constant 0 : index
    %c0_4 = arith.constant 0 : index
    %4 = vector.load %arg3[%c0_3, %c0_4] : memref<1x256xf32, #tpu.memory_space<vmem>>, vector<1x256xf32>
    %5 = vector.broadcast %4 : vector<1x256xf32> to vector<8x256xf32>
    %6 = arith.addf %3, %5 : vector<8x256xf32>
    %cst_5 = arith.constant 0.000000e+00 : f32
    %7 = vector.broadcast %cst_5 : f32 to vector<8x256xf32>
    %8 = arith.maximumf %6, %7 : vector<8x256xf32>
    %9 = arith.truncf %8 : vector<8x256xf32> to vector<8x256xbf16>
    %c0_6 = arith.constant 0 : index
    %c0_7 = arith.constant 0 : index
    %10 = vector.load %arg4[%c0_6, %c0_7] : memref<256x64xbf16, #tpu.memory_space<vmem>>, vector<256x64xbf16>
    %cst_8 = arith.constant dense<0.000000e+00> : vector<8x64xf32>
    %11 = tpu.matmul %9, %10, %cst_8 {dimension_numbers = #tpu.dot_dimension_numbers<[1], [0], [0], [1], [0, 0, 1, 1], [], []>} : vector<8x256xbf16>, vector<256x64xbf16>, vector<8x64xf32> -> vector<8x64xf32>
    %c0_9 = arith.constant 0 : index
    %c0_10 = arith.constant 0 : index
    %12 = vector.load %arg5[%c0_9, %c0_10] : memref<1x64xf32, #tpu.memory_space<vmem>>, vector<1x64xf32>
    %13 = vector.broadcast %12 : vector<1x64xf32> to vector<8x64xf32>
    %14 = arith.addf %11, %13 : vector<8x64xf32>
    %cst_11 = arith.constant 0.000000e+00 : f32
    %15 = vector.broadcast %cst_11 : f32 to vector<8x64xf32>
    %16 = arith.maximumf %14, %15 : vector<8x64xf32>
    %17 = arith.truncf %16 : vector<8x64xf32> to vector<8x64xbf16>
    %c0_12 = arith.constant 0 : index
    %c0_13 = arith.constant 0 : index
    %18 = vector.load %arg6[%c0_12, %c0_13] : memref<64x10xbf16, #tpu.memory_space<vmem>>, vector<64x10xbf16>
    %cst_14 = arith.constant dense<0.000000e+00> : vector<8x10xf32>
    %19 = tpu.matmul %17, %18, %cst_14 {dimension_numbers = #tpu.dot_dimension_numbers<[1], [0], [0], [1], [0, 0, 1, 1], [], []>} : vector<8x64xbf16>, vector<64x10xbf16>, vector<8x10xf32> -> vector<8x10xf32>
    %c0_15 = arith.constant 0 : index
    %c0_16 = arith.constant 0 : index
    %20 = vector.load %arg7[%c0_15, %c0_16] : memref<1x10xf32, #tpu.memory_space<vmem>>, vector<1x10xf32>
    %21 = vector.broadcast %20 : vector<1x10xf32> to vector<8x10xf32>
    %22 = arith.addf %19, %21 : vector<8x10xf32>
    %c0_17 = arith.constant 0 : index
    %c0_18 = arith.constant 0 : index
    %23 = vector.load %arg8[%c0_17, %c0_18] : memref<8x10xf32, #tpu.memory_space<vmem>>, vector<8x10xf32>
    tpu.vector_store %arg8[%c0_17, %c0_18], %22 {strides = array<i32>} : memref<8x10xf32, #tpu.memory_space<vmem>>, vector<8x10xf32>,
    return
  }
  func.func @transform_0(%arg0: i32) -> (i32, i32) {
    %c0_i32 = arith.constant 0 : i32
    %c0_i32_0 = arith.constant 0 : i32
    return %arg0, %c0_i32 : i32, i32
  }
  func.func @transform_1(%arg0: i32) -> (i32, i32) {
    %c0_i32 = arith.constant 0 : i32
    %c0_i32_0 = arith.constant 0 : i32
    %c0_i32_1 = arith.constant 0 : i32
    return %c0_i32, %c0_i32_0 : i32, i32
  }
  func.func @transform_2(%arg0: i32) -> (i32, i32) {
    %c0_i32 = arith.constant 0 : i32
    %c0_i32_0 = arith.constant 0 : i32
    %c0_i32_1 = arith.constant 0 : i32
    return %c0_i32, %c0_i32_0 : i32, i32
  }
  func.func @transform_3(%arg0: i32) -> (i32, i32) {
    %c0_i32 = arith.constant 0 : i32
    %c0_i32_0 = arith.constant 0 : i32
    %c0_i32_1 = arith.constant 0 : i32
    return %c0_i32, %c0_i32_0 : i32, i32
  }
  func.func @transform_4(%arg0: i32) -> (i32, i32) {
    %c0_i32 = arith.constant 0 : i32
    %c0_i32_0 = arith.constant 0 : i32
    %c0_i32_1 = arith.constant 0 : i32
    return %c0_i32, %c0_i32_0 : i32, i32
  }
  func.func @transform_5(%arg0: i32) -> (i32, i32) {
    %c0_i32 = arith.constant 0 : i32
    %c0_i32_0 = arith.constant 0 : i32
    %c0_i32_1 = arith.constant 0 : i32
    return %c0_i32, %c0_i32_0 : i32, i32
  }
  func.func @transform_6(%arg0: i32) -> (i32, i32) {
    %c0_i32 = arith.constant 0 : i32
    %c0_i32_0 = arith.constant 0 : i32
    %c0_i32_1 = arith.constant 0 : i32
    return %c0_i32, %c0_i32_0 : i32, i32
  }
  func.func @transform_7(%arg0: i32) -> (i32, i32) {
    %c0_i32 = arith.constant 0 : i32
    %c0_i32_0 = arith.constant 0 : i32
    return %arg0, %c0_i32 : i32, i32
  }
}

</mosaic_0001>

<llo_original>
// kernel: tpu_custom_call.1
$region0: #{tpu_custom_call.1}
  #allocation0 [shape = 'u32[]', space=smem, size = 0x4, offset = 0x4, fixed_abs, tag = 'smem constant byte address 0x4 - core index']
  #allocation1 [shape = 'u32[144,128]{1,0:T(1,128)}', space=vmem, size = 0x12000, scoped, tag = 'internal scratch']
  %s0 = inlined_call_operand.vmem [shape: f32[8,32], index: 0, kind: input, shape index: {}]
  %s1 = inlined_call_operand.vmem [shape: bf16[32,256], index: 1, kind: input, shape index: {}]
  %s2 = inlined_call_operand.vmem [shape: f32[1,256], index: 2, kind: input, shape index: {}]
  %s3 = inlined_call_operand.vmem [shape: bf16[256,64], index: 3, kind: input, shape index: {}]
  %s4 = inlined_call_operand.vmem [shape: f32[1,64], index: 4, kind: input, shape index: {}]
  %s5 = inlined_call_operand.vmem [shape: bf16[64,10], index: 5, kind: input, shape index: {}]
  %s6 = inlined_call_operand.vmem [shape: f32[1,10], index: 6, kind: input, shape index: {}]
  %s7 = inlined_call_operand.hbm [shape: f32[8,10], index: 7, kind: output, shape index: {}]
  %s8 = sld [smem:[#allocation0]]
  $region38: #{tpu_custom_call.1} parent=0
    _
  %s10 = ssub.s32 1, %s8
  %s11 = scalar_select 0, %s10, %s8
  $region1: #{tpu_custom_call.1} parent=0
    #allocation2 [shape = 'u8[4096]{0}', space=vmem, size = 0x1000, scoped, tag = 'output window, operand 0, single buffered']
    #allocation3 [shape = 's32[1]{0}', space=sflag, size = 0x4, scoped, tag = 'scoped memory for tpu_custom_call.1']
    %12 = vsyncpa [#allocation3], 0
    // Predicated region
    $region2: #{tpu_custom_call.1} parent=1 // pred_check
      _
    $region3: #{tpu_custom_call.1} parent=1 // pred_check_branch
      %14 = sbr.rel (0) target = $region5
    $region4: #{tpu_custom_call.1} parent=1 // pred_region
      _
    $region5: #{tpu_custom_call.1} parent=1 // pred_fallthru
      _
    // Predicated region
    $region6: #{tpu_custom_call.1} parent=1 // pred_check
      _
    $region7: #{tpu_custom_call.1} parent=1 // pred_check_branch
      %16 = sbr.rel (0) target = $region9
    $region8: #{tpu_custom_call.1} parent=1 // pred_region
      _
    $region9: #{tpu_custom_call.1} parent=1 // pred_fallthru
      _
    // Predicated region
    $region10: #{tpu_custom_call.1} parent=1 // pred_check
      _
    $region11: #{tpu_custom_call.1} parent=1 // pred_check_branch
      %18 = sbr.rel (0) target = $region13
    $region12: #{tpu_custom_call.1} parent=1 // pred_region
      _
    $region13: #{tpu_custom_call.1} parent=1 // pred_fallthru
      _
    // Predicated region
    $region14: #{tpu_custom_call.1} parent=1 // pred_check
      _
    $region15: #{tpu_custom_call.1} parent=1 // pred_check_branch
      %20 = sbr.rel (0) target = $region17
    $region16: #{tpu_custom_call.1} parent=1 // pred_region
      _
    $region17: #{tpu_custom_call.1} parent=1 // pred_fallthru
      _
    // Predicated region
    $region18: #{tpu_custom_call.1} parent=1 // pred_check
      _
    $region19: #{tpu_custom_call.1} parent=1 // pred_check_branch
      %22 = sbr.rel (0) target = $region21
    $region20: #{tpu_custom_call.1} parent=1 // pred_region
      _
    $region21: #{tpu_custom_call.1} parent=1 // pred_fallthru
      _
    // Predicated region
    $region22: #{tpu_custom_call.1} parent=1 // pred_check
      _
    $region23: #{tpu_custom_call.1} parent=1 // pred_check_branch
      %24 = sbr.rel (0) target = $region25
    $region24: #{tpu_custom_call.1} parent=1 // pred_region
      _
    $region25: #{tpu_custom_call.1} parent=1 // pred_fallthru
      _
    // Predicated region
    $region26: #{tpu_custom_call.1} parent=1 // pred_check
      _
    $region27: #{tpu_custom_call.1} parent=1 // pred_check_branch
      %26 = sbr.rel (0) target = $region29
    $region28: #{tpu_custom_call.1} parent=1 // pred_region
      _
    $region29: #{tpu_custom_call.1} parent=1 // pred_fallthru
      _
    %v28 = vld [vmem:[%s0] sm:$0xff]
    %v29 = vpack.c.bf16 %v28, %v28
    %v30 = vld [vmem:[%s1] sm:$0xff]
    %v31 = vld [vmem:[%s1 + $0x8] sm:$0xff]
    %v32 = vld [vmem:[%s1 + $0x10] sm:$0xff]
    %v33 = vld [vmem:[%s1 + $0x18] sm:$0xff]
    %v34 = vld [vmem:[%s2] sm:$0x3]
    %v36 = vlaneseq
    %v37 = vshrl.u32 %v36, 7
    %v38 = vsub.s32 0, %v37
    %v39 = vrot.slane %v34, %v38
    %v40 = vlaneseq
    %v41 = vshrl.u32 %v40, 7
    %v42 = vsub.s32 1, %v41
    %v43 = vrot.slane %v34, %v42
    %v50 = vunpack.c.l.b16 %v30
    %v51 = vunpack.c.h.b16 %v30
    %v52 = vunpack.c.l.b16 %v31
    %v53 = vunpack.c.h.b16 %v31
    %v54 = vunpack.c.l.b16 %v32
    %v55 = vunpack.c.h.b16 %v32
    %v56 = vunpack.c.l.b16 %v33
    %v57 = vunpack.c.h.b16 %v33
    %v58 = vpack.c.b16 %v52, %v50
    %v59 = vpack.c.b16 %v53, %v51
    %v60 = vpack.c.b16 %v56, %v54
    %v61 = vpack.c.b16 %v57, %v55
    %vm66 = vcmask 261120
    %v68 = vsel %vm66, %v29, 0
    %70 = vmatprep.subr.bf16.mxu0 %v59
    %71 = vmatpush1.bf16.msra.mxu0 %v58
    %72 = vmatprep.subr.bf16.mxu0 %v61
    %73 = vmatpush1.bf16.msra.mxu0 %v60
    %74 = vmatprep.subr.bf16.mxu0 0
    %75 = vmatpush1.bf16.msra.mxu0 0
    %76 = vmatprep.subr.bf16.mxu0 0
    %77 = vmatpush1.bf16.msra.mxu0 0
    %78 = vmatprep.subr.bf16.mxu0 0
    %79 = vmatpush1.bf16.msra.mxu0 0
    %80 = vmatprep.subr.bf16.mxu0 0
    %81 = vmatpush1.bf16.msra.mxu0 0
    %82 = vmatprep.subr.bf16.mxu0 0
    %83 = vmatpush1.bf16.msra.mxu0 0
    %84 = vmatprep.subr.bf16.mxu0 0
    %85 = vmatpush1.bf16.msra.mxu0 0
    %86 = vmatprep.subr.bf16.mxu0 0
    %87 = vmatpush1.bf16.msra.mxu0 0
    %88 = vmatprep.subr.bf16.mxu0 0
    %89 = vmatpush1.bf16.msra.mxu0 0
    %90 = vmatprep.subr.bf16.mxu0 0
    %91 = vmatpush1.bf16.msra.mxu0 0
    %92 = vmatprep.subr.bf16.mxu0 0
    %93 = vmatpush1.bf16.msra.mxu0 0
    %94 = vmatprep.subr.bf16.mxu0 0
    %95 = vmatpush1.bf16.msra.mxu0 0
    %96 = vmatprep.subr.bf16.mxu0 0
    %97 = vmatpush1.bf16.msra.mxu0 0
    %98 = vmatprep.subr.bf16.mxu0 0
    %99 = vmatpush1.bf16.msra.mxu0 0
    %100 = vmatprep.subr.bf16.mxu0 0
    %101 = vmatpush1.bf16.msra.mxu0 0
    %102 = vmatprep.mubr.bf16.mxu0 0
    %103 = vmatmul.mubr.bf16.gmra.mrb[0].mxu0 %v68
    %v104 = vpop.f32.mrb[0].mxu0
    %v105 = vadd.f32 %v39, %v104
    %v106 = vpop.f32.mrb[0].mxu0
    %v107 = vadd.f32 %v43, %v106
    %v108 = vpop.f32.mrb[0].mxu0
    %v109 = vpop.f32.mrb[0].mxu0
    %110 = vdwg.mxu0
    %v111 = vmax.f32 %v105, 0.0
    %v112 = vmax.f32 %v107, 0.0
    %v113 = vpack.c.bf16 %v111, %v111
    %v114 = vpack.c.bf16 %v112, %v112
    %v115 = vld [vmem:[%s3] sm:$0xf]
    %v116 = vld [vmem:[%s3 + $0x4] sm:$0xf]
    %v117 = vld [vmem:[%s3 + $0x8] sm:$0xf]
    %v118 = vld [vmem:[%s3 + $0xc] sm:$0xf]
    %v119 = vld [vmem:[%s3 + $0x10] sm:$0xf]
    %v120 = vld [vmem:[%s3 + $0x14] sm:$0xf]
    %v121 = vld [vmem:[%s3 + $0x18] sm:$0xf]
    %v122 = vld [vmem:[%s3 + $0x1c] sm:$0xf]
    %v123 = vld [vmem:[%s3 + $0x20] sm:$0xf]
    %v124 = vld [vmem:[%s3 + $0x24] sm:$0xf]
    %v125 = vld [vmem:[%s3 + $0x28] sm:$0xf]
    %v126 = vld [vmem:[%s3 + $0x2c] sm:$0xf]
    %v127 = vld [vmem:[%s3 + $0x30] sm:$0xf]
    %v128 = vld [vmem:[%s3 + $0x34] sm:$0xf]
    %v129 = vld [vmem:[%s3 + $0x38] sm:$0xf]
    %v130 = vld [vmem:[%s3 + $0x3c] sm:$0xf]
    %v131 = vld [vmem:[%s3 + $0x40] sm:$0xf]
    %v132 = vld [vmem:[%s3 + $0x44] sm:$0xf]
    %v133 = vld [vmem:[%s3 + $0x48] sm:$0xf]
    %v134 = vld [vmem:[%s3 + $0x4c] sm:$0xf]
    %v135 = vld [vmem:[%s3 + $0x50] sm:$0xf]
    %v136 = vld [vmem:[%s3 + $0x54] sm:$0xf]
    %v137 = vld [vmem:[%s3 + $0x58] sm:$0xf]
    %v138 = vld [vmem:[%s3 + $0x5c] sm:$0xf]
    %v139 = vld [vmem:[%s3 + $0x60] sm:$0xf]
    %v140 = vld [vmem:[%s3 + $0x64] sm:$0xf]
    %v141 = vld [vmem:[%s3 + $0x68] sm:$0xf]
    %v142 = vld [vmem:[%s3 + $0x6c] sm:$0xf]
    %v143 = vld [vmem:[%s3 + $0x70] sm:$0xf]
    %v144 = vld [vmem:[%s3 + $0x74] sm:$0xf]
    %v145 = vld [vmem:[%s3 + $0x78] sm:$0xf]
    %v146 = vld [vmem:[%s3 + $0x7c] sm:$0xf]
    %v147 = vld [vmem:[%s4] sm:$0x1]
    %v149 = vlaneseq
    %v150 = vshrl.u32 %v149, 7
    %v151 = vsub.s32 0, %v150
    %v152 = vrot.slane %v147, %v151
    %v186 = vunpack.c.l.b16 %v115
    %v187 = vunpack.c.l.b16 %v116
    %v188 = vunpack.c.l.b16 %v117
    %v189 = vunpack.c.l.b16 %v118
    %v190 = vunpack.c.l.b16 %v119
    %v191 = vunpack.c.l.b16 %v120
    %v192 = vunpack.c.l.b16 %v121
    %v193 = vunpack.c.l.b16 %v122
    %v194 = vunpack.c.l.b16 %v123
    %v195 = vunpack.c.l.b16 %v124
    %v196 = vunpack.c.l.b16 %v125
    %v197 = vunpack.c.l.b16 %v126
    %v198 = vunpack.c.l.b16 %v127
    %v199 = vunpack.c.l.b16 %v128
    %v200 = vunpack.c.l.b16 %v129
    %v201 = vunpack.c.l.b16 %v130
    %v202 = vunpack.c.l.b16 %v131
    %v203 = vunpack.c.l.b16 %v132
    %v204 = vunpack.c.l.b16 %v133
    %v205 = vunpack.c.l.b16 %v134
    %v206 = vunpack.c.l.b16 %v135
    %v207 = vunpack.c.l.b16 %v136
    %v208 = vunpack.c.l.b16 %v137
    %v209 = vunpack.c.l.b16 %v138
    %v210 = vunpack.c.l.b16 %v139
    %v211 = vunpack.c.l.b16 %v140
    %v212 = vunpack.c.l.b16 %v141
    %v213 = vunpack.c.l.b16 %v142
    %v214 = vunpack.c.l.b16 %v143
    %v215 = vunpack.c.l.b16 %v144
    %v216 = vunpack.c.l.b16 %v145
    %v217 = vunpack.c.l.b16 %v146
    %v218 = vpack.c.b16 %v187, %v186
    %v219 = vpack.c.b16 %v189, %v188
    %v220 = vpack.c.b16 %v191, %v190
    %v221 = vpack.c.b16 %v193, %v192
    %v222 = vpack.c.b16 %v195, %v194
    %v223 = vpack.c.b16 %v197, %v196
    %v224 = vpack.c.b16 %v199, %v198
    %v225 = vpack.c.b16 %v201, %v200
    %v226 = vpack.c.b16 %v203, %v202
    %v227 = vpack.c.b16 %v205, %v204
    %v228 = vpack.c.b16 %v207, %v206
    %v229 = vpack.c.b16 %v209, %v208
    %v230 = vpack.c.b16 %v211, %v210
    %v231 = vpack.c.b16 %v213, %v212
    %v232 = vpack.c.b16 %v215, %v214
    %v233 = vpack.c.b16 %v217, %v216
    %250 = vmatprep.subr.bf16.mxu0 0
    %251 = vmatpush1.bf16.msra.mxu0 %v218
    %252 = vmatprep.subr.bf16.mxu0 0
    %253 = vmatpush1.bf16.msra.mxu0 %v219
    %254 = vmatprep.subr.bf16.mxu0 0
    %255 = vmatpush1.bf16.msra.mxu0 %v220
    %256 = vmatprep.subr.bf16.mxu0 0
    %257 = vmatpush1.bf16.msra.mxu0 %v221
    %258 = vmatprep.subr.bf16.mxu0 0
    %259 = vmatpush1.bf16.msra.mxu0 %v222
    %260 = vmatprep.subr.bf16.mxu0 0
    %261 = vmatpush1.bf16.msra.mxu0 %v223
    %262 = vmatprep.subr.bf16.mxu0 0
    %263 = vmatpush1.bf16.msra.mxu0 %v224
    %264 = vmatprep.subr.bf16.mxu0 0
    %265 = vmatpush1.bf16.msra.mxu0 %v225
    %266 = vmatprep.subr.bf16.mxu0 0
    %267 = vmatpush1.bf16.msra.mxu0 %v226
    %268 = vmatprep.subr.bf16.mxu0 0
    %269 = vmatpush1.bf16.msra.mxu0 %v227
    %270 = vmatprep.subr.bf16.mxu0 0
    %271 = vmatpush1.bf16.msra.mxu0 %v228
    %272 = vmatprep.subr.bf16.mxu0 0
    %273 = vmatpush1.bf16.msra.mxu0 %v229
    %274 = vmatprep.subr.bf16.mxu0 0
    %275 = vmatpush1.bf16.msra.mxu0 %v230
    %276 = vmatprep.subr.bf16.mxu0 0
    %277 = vmatpush1.bf16.msra.mxu0 %v231
    %278 = vmatprep.subr.bf16.mxu0 0
    %279 = vmatpush1.bf16.msra.mxu0 %v232
    %280 = vmatprep.subr.bf16.mxu0 0
    %281 = vmatpush1.bf16.msra.mxu0 %v233
    %282 = vmatprep.mubr.bf16.mxu0 %v114
    %283 = vmatmul.mubr.bf16.gmra.mrb[0].mxu0 %v113
    %v284 = vpop.f32.mrb[0].mxu0
    %v285 = vadd.f32 %v152, %v284
    %v286 = vpop.f32.mrb[0].mxu0
    %v287 = vpop.f32.mrb[0].mxu0
    %v288 = vpop.f32.mrb[0].mxu0
    %289 = vdwg.mxu0
    %v290 = vmax.f32 %v285, 0.0
    %v291 = vpack.c.bf16 %v290, %v290
    %v292 = vld [vmem:[%s5] sm:$0xf]
    %v293 = vld [vmem:[%s5 + $0x4] sm:$0xf]
    %v294 = vld [vmem:[%s5 + $0x8] sm:$0xf]
    %v295 = vld [vmem:[%s5 + $0xc] sm:$0xf]
    %v296 = vld [vmem:[%s5 + $0x10] sm:$0xf]
    %v297 = vld [vmem:[%s5 + $0x14] sm:$0xf]
    %v298 = vld [vmem:[%s5 + $0x18] sm:$0xf]
    %v299 = vld [vmem:[%s5 + $0x1c] sm:$0xf]
    %v300 = vld [vmem:[%s6] sm:$0x1]
    %v302 = vlaneseq
    %v303 = vshrl.u32 %v302, 7
    %v304 = vsub.s32 0, %v303
    %v305 = vrot.slane %v300, %v304
    %v315 = vunpack.c.l.b16 %v292
    %v316 = vunpack.c.l.b16 %v293
    %v317 = vunpack.c.l.b16 %v294
    %v318 = vunpack.c.l.b16 %v295
    %v319 = vunpack.c.l.b16 %v296
    %v320 = vunpack.c.l.b16 %v297
    %v321 = vunpack.c.l.b16 %v298
    %v322 = vunpack.c.l.b16 %v299
    %v323 = vpack.c.b16 %v316, %v315
    %v324 = vpack.c.b16 %v318, %v317
    %v325 = vpack.c.b16 %v320, %v319
    %v326 = vpack.c.b16 %v322, %v321
    %vm331 = vcmask 523264
    %v333 = vsel %vm331, %v291, 0
    %335 = vmatprep.subr.bf16.mxu0 0
    %336 = vmatpush1.bf16.msra.mxu0 %v323
    %337 = vmatprep.subr.bf16.mxu0 0
    %338 = vmatpush1.bf16.msra.mxu0 %v324
    %339 = vmatprep.subr.bf16.mxu0 0
    %340 = vmatpush1.bf16.msra.mxu0 %v325
    %341 = vmatprep.subr.bf16.mxu0 0
    %342 = vmatpush1.bf16.msra.mxu0 %v326
    %343 = vmatprep.subr.bf16.mxu0 0
    %344 = vmatpush1.bf16.msra.mxu0 0
    %345 = vmatprep.subr.bf16.mxu0 0
    %346 = vmatpush1.bf16.msra.mxu0 0
    %347 = vmatprep.subr.bf16.mxu0 0
    %348 = vmatpush1.bf16.msra.mxu0 0
    %349 = vmatprep.subr.bf16.mxu0 0
    %350 = vmatpush1.bf16.msra.mxu0 0
    %351 = vmatprep.subr.bf16.mxu0 0
    %352 = vmatpush1.bf16.msra.mxu0 0
    %353 = vmatprep.subr.bf16.mxu0 0
    %354 = vmatpush1.bf16.msra.mxu0 0
    %355 = vmatprep.subr.bf16.mxu0 0
    %356 = vmatpush1.bf16.msra.mxu0 0
    %357 = vmatprep.subr.bf16.mxu0 0
    %358 = vmatpush1.bf16.msra.mxu0 0
    %359 = vmatprep.subr.bf16.mxu0 0
    %360 = vmatpush1.bf16.msra.mxu0 0
    %361 = vmatprep.subr.bf16.mxu0 0
    %362 = vmatpush1.bf16.msra.mxu0 0
    %363 = vmatprep.subr.bf16.mxu0 0
    %364 = vmatpush1.bf16.msra.mxu0 0
    %365 = vmatprep.subr.bf16.mxu0 0
    %366 = vmatpush1.bf16.msra.mxu0 0
    %367 = vmatprep.mubr.bf16.mxu0 0
    %368 = vmatmul.mubr.bf16.gmra.mrb[0].mxu0 %v333
    %v369 = vpop.f32.mrb[0].mxu0
    %v370 = vadd.f32 %v305, %v369
    %v371 = vpop.f32.mrb[0].mxu0
    %v372 = vpop.f32.mrb[0].mxu0
    %v373 = vpop.f32.mrb[0].mxu0
    %374 = vdwg.mxu0
    %vm375 = vcmask 80896
    %376 = vst.msk [vmem:[#allocation2] sm:$0xff] %vm375, %v370
    // Predicated region
    $region30: #{tpu_custom_call.1} parent=1 // pred_check
      _
    $region31: #{tpu_custom_call.1} parent=1 // pred_check_branch
      %378 = sbr.rel (0) target = $region33
    $region32: #{tpu_custom_call.1} parent=1 // pred_region
      %s380 = ssub.s32 128, 128
      %381 = vsyncadd [#allocation3], %s380
      %s383 = sshll.u32 [#allocation2], 4
      %s384 = int_to_ptr.vmem [resolvable:$true] %s383
      %386 = dma.vmem_to_hbm [thread:$0]  %s384, 128, %s7, [#allocation3]
    $region33: #{tpu_custom_call.1} parent=1 // pred_fallthru
      _
    // Predicated region
    $region34: #{tpu_custom_call.1} parent=1 // pred_check
      _
    $region35: #{tpu_custom_call.1} parent=1 // pred_check_branch
      %388 = sbr.rel (0) target = $region37
    $region36: #{tpu_custom_call.1} parent=1 // pred_region
      %389 = dma.done [#allocation3], 128
    $region37: #{tpu_custom_call.1} parent=1 // pred_fallthru
      _
    %390 = vsyncpa [#allocation3], 1

</llo_original>
